<compile_context>
chip_gen: v6e
topology: v6e:2x2x1
jax: 0.10.0
libtpu: 0.0.40
codegen_flags: <defaults>
</compile_context>

<pallas_src>
import functools
import math

import jax
import jax.numpy as jnp
from jax.experimental import pallas as pl
from jax.experimental.pallas import tpu as pltpu

_C = 0.7071067811865476           # 1/sqrt(2), the Haar wavelet tap
_SQRT2 = math.sqrt(2.0)

_TARGET_ELEMS = 64 * 1024         # elements per polyphase component per block (~2 MiB/block)
_MAX_TM = 64                      # sublane-axis tile cap


def _haar_kernel(x_ref, o_ref, *, scale):
    """x_ref / o_ref: (8, tM, tN).

    Input pages are the 8 polyphase samples of each 2x2x2 window
    (p = 4*dt + 2*dh + dw); output pages are the 8 subbands in torch's cat
    order [lll, llh, lhl, lhh, hll, hlh, hhl, hhh] (first letter = T axis).
    """
    # Stage 1: Haar along W (dw).  Filter taps are folded into `scale`.
    s_w = {}
    for dt in (0, 1):
        for dh in (0, 1):
            a0 = x_ref[4 * dt + 2 * dh + 0]
            a1 = x_ref[4 * dt + 2 * dh + 1]
            s_w[(dt, dh, 0)] = a0 + a1
            s_w[(dt, dh, 1)] = a0 - a1

    # Stage 2: Haar along H (dh).
    s_h = {}
    for dt in (0, 1):
        for sw in (0, 1):
            b0 = s_w[(dt, 0, sw)]
            b1 = s_w[(dt, 1, sw)]
            s_h[(dt, 0, sw)] = b0 + b1
            s_h[(dt, 1, sw)] = b0 - b1

    # Stage 3: Haar along T (dt); single scale multiply folded into the store.
    for sh in (0, 1):
        for sw in (0, 1):
            c0 = s_h[(0, sh, sw)]
            c1 = s_h[(1, sh, sw)]
            o_ref[0 + 2 * sh + sw] = ((c0 + c1) * scale).astype(o_ref.dtype)
            o_ref[4 + 2 * sh + sw] = ((c0 - c1) * scale).astype(o_ref.dtype)


def _pick_tile(dim, quantum, target):
    """Largest t <= target that is a multiple of `quantum` and divides `dim`;
    falls back to the full dim (always legal for the last two block dims)."""
    if dim % quantum != 0:
        return dim
    t = min((max(target, quantum) // quantum) * quantum, dim)
    while t >= quantum:
        if dim % t == 0:
            return t
        t -= quantum
    return dim


def patcher_forward(x, rescale=True):
    """Equivalent of Patcher.forward: (B, C, T, H, W) -> (B, 8C, ceil(T/2), ceil(H/2), ceil(W/2))."""
    B, C, T, H, W = x.shape

    # F.pad(x, (0,1,0,1,0,1), mode='reflect') — only odd axes actually need it.
    pt, ph, pw = T % 2, H % 2, W % 2
    if pt or ph or pw:
        x = jnp.pad(x, ((0, 0), (0, 0), (0, pt), (0, ph), (0, pw)), mode="reflect")
    T2, H2, W2 = (T + pt) // 2, (H + ph) // 2, (W + pw) // 2

    # Polyphase split: (B,C,T2,2,H2,2,W2,2) -> (8, B, C*T2, H2*W2)
    #   page p = 4*dt + 2*dh + dw ; m = c*T2 + t2 (sublanes) ; n = h2*W2 + w2 (lanes)
    xr = x.reshape(B, C, T2, 2, H2, 2, W2, 2)
    xr = jnp.transpose(xr, (3, 5, 7, 0, 1, 2, 4, 6))
    M = C * T2
    N = H2 * W2
    xr = xr.reshape(8, B, M, N)

    tm = _pick_tile(M, 8, _MAX_TM)
    tn = _pick_tile(N, 128, max(128, _TARGET_ELEMS // tm))
    block_bytes = 8 * tm * tn * x.dtype.itemsize
    # 2 arrays x 2 pipeline buffers + elementwise temporaries, with headroom.
    vmem_limit = int(min(max(32 << 20, 9 * block_bytes + (2 << 20)), 48 << 20))

    # Three 1/sqrt(2) conv stages + optional 2*sqrt(2) rescale.
    scale = (_C ** 3) * ((2.0 * _SQRT2) if rescale else 1.0)

    out = pl.pallas_call(
        functools.partial(_haar_kernel, scale=scale),
        out_shape=jax.ShapeDtypeStruct((B, 8, M, N), x.dtype),
        grid_spec=pltpu.PrefetchScalarGridSpec(
            num_scalar_prefetch=0,
            grid=(B, M // tm, N // tn),
            in_specs=[pl.BlockSpec((8, None, tm, tn), lambda b, m, n: (0, b, m, n))],
            out_specs=pl.BlockSpec((None, 8, tm, tn), lambda b, m, n: (b, 0, m, n)),
        ),
        compiler_params=pltpu.CompilerParams(
            dimension_semantics=("parallel", "parallel", "parallel"),
            vmem_limit_bytes=vmem_limit,
        ),
    )(xr)

    # (B, 8, C*T2, H2*W2) already matches torch's cat channel order (s*C + c);
    # the final reshape is a free contiguous reshape (no HBM transpose).
    return out.reshape(B, 8 * C, T2, H2, W2)


def _patcher_reference(x, rescale=True):
    """Pure-JAX reference mirroring the torch grouped-conv3d structure."""
    B, C, T, H, W = x.shape
    xpad = jnp.pad(x, ((0, 0), (0, 0), (0, 1), (0, 1), (0, 1)), mode="reflect")
    hl = jnp.array([_C, _C], x.dtype)
    hh = jnp.array([_C, -_C], x.dtype)
    T2 = (T - 1) // 2 + 1
    H2 = (H - 1) // 2 + 1
    W2 = (W - 1) // 2 + 1

    def conv_axis(v, f, axis, out_len):
        s0 = [slice(None)] * v.ndim
        s1 = [slice(None)] * v.ndim
        s0[axis] = slice(0, 2 * out_len, 2)
        s1[axis] = slice(1, 2 * out_len, 2)
        return f[0] * v[tuple(s0)] + f[1] * v[tuple(s1)]

    xl = conv_axis(xpad, hl, 2, T2)
    xh = conv_axis(xpad, hh, 2, T2)
    xll = conv_axis(xl, hl, 3, H2)
    xlh = conv_axis(xl, hh, 3, H2)
    xhl = conv_axis(xh, hl, 3, H2)
    xhh = conv_axis(xh, hh, 3, H2)
    subs = [
        conv_axis(xll, hl, 4, W2), conv_axis(xll, hh, 4, W2),
        conv_axis(xlh, hl, 4, W2), conv_axis(xlh, hh, 4, W2),
        conv_axis(xhl, hl, 4, W2), conv_axis(xhl, hh, 4, W2),
        conv_axis(xhh, hl, 4, W2), conv_axis(xhh, hh, 4, W2),
    ]
    out = jnp.concatenate(subs, axis=1)
    if rescale:
        out = out * (2.0 * _SQRT2)
    return out


if __name__ == "__main__":
    key = jax.random.PRNGKey(0)

    # Test 1: even spatial dims (pad skipped).
    B, C, T, H, W = 2, 4, 8, 16, 16
    x = jax.random.normal(key, (B, C, T, H, W), dtype=jnp.float32)
    out = jax.block_until_ready(patcher_forward(x, rescale=True))
    ref = _patcher_reference(x, rescale=True)
    assert out.shape == (B, 8 * C, T // 2, H // 2, W // 2), out.shape
    assert jnp.allclose(out, ref, rtol=1e-5, atol=1e-5), float(jnp.max(jnp.abs(out - ref)))

    # Test 2: odd spatial dims (reflect pad path, non-aligned full-dim tiles).
    x2 = jax.random.normal(jax.random.PRNGKey(0), (1, 3, 5, 6, 7), dtype=jnp.float32)
    out2 = jax.block_until_ready(patcher_forward(x2, rescale=True))
    ref2 = _patcher_reference(x2, rescale=True)
    assert out2.shape == (1, 24, 3, 3, 4), out2.shape
    assert jnp.allclose(out2, ref2, rtol=1e-5, atol=1e-5), float(jnp.max(jnp.abs(out2 - ref2)))

    print("KERNEL_OK")
</pallas_src>

<mosaic_0001>
module attributes {stable_mosaic.version = 11 : i64} {
  func.func @_haar_kernel(%arg0: i32, %arg1: i32, %arg2: i32, %arg3: memref<8x1x16x64xf32, #tpu.memory_space<vmem>>, %arg4: memref<1x8x16x64xf32, #tpu.memory_space<vmem>>) attributes {dimension_semantics = [#tpu.dimension_semantics<parallel>, #tpu.dimension_semantics<parallel>, #tpu.dimension_semantics<parallel>], iteration_bounds = array<i64: 2, 1, 1>, scalar_prefetch = 0 : i64, scratch_operands = 0 : i64, tpu.core_type = #tpu.core_type<tc>, window_params = [{transform_indices = @transform_0, window_bounds = array<i64: 8, 1, 16, 64>}, {transform_indices = @transform_1, window_bounds = array<i64: 1, 8, 16, 64>}]} {
    %c0 = arith.constant 0 : index
    %c0_0 = arith.constant 0 : index
    %c0_1 = arith.constant 0 : index
    %c0_2 = arith.constant 0 : index
    %0 = vector.load %arg3[%c0, %c0_0, %c0_1, %c0_2] : memref<8x1x16x64xf32, #tpu.memory_space<vmem>>, vector<1x1x16x64xf32>
    %1 = vector.shape_cast %0 : vector<1x1x16x64xf32> to vector<16x64xf32>
    %c1 = arith.constant 1 : index
    %c0_3 = arith.constant 0 : index
    %c0_4 = arith.constant 0 : index
    %c0_5 = arith.constant 0 : index
    %2 = vector.load %arg3[%c1, %c0_3, %c0_4, %c0_5] : memref<8x1x16x64xf32, #tpu.memory_space<vmem>>, vector<1x1x16x64xf32>
    %3 = vector.shape_cast %2 : vector<1x1x16x64xf32> to vector<16x64xf32>
    %4 = arith.addf %1, %3 : vector<16x64xf32>
    %5 = arith.subf %1, %3 : vector<16x64xf32>
    %c2 = arith.constant 2 : index
    %c0_6 = arith.constant 0 : index
    %c0_7 = arith.constant 0 : index
    %c0_8 = arith.constant 0 : index
    %6 = vector.load %arg3[%c2, %c0_6, %c0_7, %c0_8] : memref<8x1x16x64xf32, #tpu.memory_space<vmem>>, vector<1x1x16x64xf32>
    %7 = vector.shape_cast %6 : vector<1x1x16x64xf32> to vector<16x64xf32>
    %c3 = arith.constant 3 : index
    %c0_9 = arith.constant 0 : index
    %c0_10 = arith.constant 0 : index
    %c0_11 = arith.constant 0 : index
    %8 = vector.load %arg3[%c3, %c0_9, %c0_10, %c0_11] : memref<8x1x16x64xf32, #tpu.memory_space<vmem>>, vector<1x1x16x64xf32>
    %9 = vector.shape_cast %8 : vector<1x1x16x64xf32> to vector<16x64xf32>
    %10 = arith.addf %7, %9 : vector<16x64xf32>
    %11 = arith.subf %7, %9 : vector<16x64xf32>
    %c4 = arith.constant 4 : index
    %c0_12 = arith.constant 0 : index
    %c0_13 = arith.constant 0 : index
    %c0_14 = arith.constant 0 : index
    %12 = vector.load %arg3[%c4, %c0_12, %c0_13, %c0_14] : memref<8x1x16x64xf32, #tpu.memory_space<vmem>>, vector<1x1x16x64xf32>
    %13 = vector.shape_cast %12 : vector<1x1x16x64xf32> to vector<16x64xf32>
    %c5 = arith.constant 5 : index
    %c0_15 = arith.constant 0 : index
    %c0_16 = arith.constant 0 : index
    %c0_17 = arith.constant 0 : index
    %14 = vector.load %arg3[%c5, %c0_15, %c0_16, %c0_17] : memref<8x1x16x64xf32, #tpu.memory_space<vmem>>, vector<1x1x16x64xf32>
    %15 = vector.shape_cast %14 : vector<1x1x16x64xf32> to vector<16x64xf32>
    %16 = arith.addf %13, %15 : vector<16x64xf32>
    %17 = arith.subf %13, %15 : vector<16x64xf32>
    %c6 = arith.constant 6 : index
    %c0_18 = arith.constant 0 : index
    %c0_19 = arith.constant 0 : index
    %c0_20 = arith.constant 0 : index
    %18 = vector.load %arg3[%c6, %c0_18, %c0_19, %c0_20] : memref<8x1x16x64xf32, #tpu.memory_space<vmem>>, vector<1x1x16x64xf32>
    %19 = vector.shape_cast %18 : vector<1x1x16x64xf32> to vector<16x64xf32>
    %c7 = arith.constant 7 : index
    %c0_21 = arith.constant 0 : index
    %c0_22 = arith.constant 0 : index
    %c0_23 = arith.constant 0 : index
    %20 = vector.load %arg3[%c7, %c0_21, %c0_22, %c0_23] : memref<8x1x16x64xf32, #tpu.memory_space<vmem>>, vector<1x1x16x64xf32>
    %21 = vector.shape_cast %20 : vector<1x1x16x64xf32> to vector<16x64xf32>
    %22 = arith.addf %19, %21 : vector<16x64xf32>
    %23 = arith.subf %19, %21 : vector<16x64xf32>
    %24 = arith.addf %4, %10 : vector<16x64xf32>
    %25 = arith.subf %4, %10 : vector<16x64xf32>
    %26 = arith.addf %5, %11 : vector<16x64xf32>
    %27 = arith.subf %5, %11 : vector<16x64xf32>
    %28 = arith.addf %16, %22 : vector<16x64xf32>
    %29 = arith.subf %16, %22 : vector<16x64xf32>
    %30 = arith.addf %17, %23 : vector<16x64xf32>
    %31 = arith.subf %17, %23 : vector<16x64xf32>
    %32 = arith.addf %24, %28 : vector<16x64xf32>
    %cst = arith.constant 1.000000e+00 : f32
    %33 = vector.broadcast %cst : f32 to vector<16x64xf32>
    %34 = arith.mulf %32, %33 : vector<16x64xf32>
    %c0_24 = arith.constant 0 : index
    %c0_25 = arith.constant 0 : index
    %c0_26 = arith.constant 0 : index
    %c0_27 = arith.constant 0 : index
    %35 = vector.load %arg4[%c0_24, %c0_25, %c0_26, %c0_27] : memref<1x8x16x64xf32, #tpu.memory_space<vmem>>, vector<1x1x16x64xf32>
    %36 = vector.shape_cast %35 : vector<1x1x16x64xf32> to vector<16x64xf32>
    %37 = vector.shape_cast %34 : vector<16x64xf32> to vector<1x1x16x64xf32>
    tpu.vector_store %arg4[%c0_24, %c0_25, %c0_26, %c0_27], %37 {strides = array<i32>} : memref<1x8x16x64xf32, #tpu.memory_space<vmem>>, vector<1x1x16x64xf32>,
    %38 = arith.subf %24, %28 : vector<16x64xf32>
    %cst_28 = arith.constant 1.000000e+00 : f32
    %39 = vector.broadcast %cst_28 : f32 to vector<16x64xf32>
    %40 = arith.mulf %38, %39 : vector<16x64xf32>
    %c0_29 = arith.constant 0 : index
    %c4_30 = arith.constant 4 : index
    %c0_31 = arith.constant 0 : index
    %c0_32 = arith.constant 0 : index
    %41 = vector.load %arg4[%c0_29, %c4_30, %c0_31, %c0_32] : memref<1x8x16x64xf32, #tpu.memory_space<vmem>>, vector<1x1x16x64xf32>
    %42 = vector.shape_cast %41 : vector<1x1x16x64xf32> to vector<16x64xf32>
    %43 = vector.shape_cast %40 : vector<16x64xf32> to vector<1x1x16x64xf32>
    tpu.vector_store %arg4[%c0_29, %c4_30, %c0_31, %c0_32], %43 {strides = array<i32>} : memref<1x8x16x64xf32, #tpu.memory_space<vmem>>, vector<1x1x16x64xf32>,
    %44 = arith.addf %26, %30 : vector<16x64xf32>
    %cst_33 = arith.constant 1.000000e+00 : f32
    %45 = vector.broadcast %cst_33 : f32 to vector<16x64xf32>
    %46 = arith.mulf %44, %45 : vector<16x64xf32>
    %c0_34 = arith.constant 0 : index
    %c1_35 = arith.constant 1 : index
    %c0_36 = arith.constant 0 : index
    %c0_37 = arith.constant 0 : index
    %47 = vector.load %arg4[%c0_34, %c1_35, %c0_36, %c0_37] : memref<1x8x16x64xf32, #tpu.memory_space<vmem>>, vector<1x1x16x64xf32>
    %48 = vector.shape_cast %47 : vector<1x1x16x64xf32> to vector<16x64xf32>
    %49 = vector.shape_cast %46 : vector<16x64xf32> to vector<1x1x16x64xf32>
    tpu.vector_store %arg4[%c0_34, %c1_35, %c0_36, %c0_37], %49 {strides = array<i32>} : memref<1x8x16x64xf32, #tpu.memory_space<vmem>>, vector<1x1x16x64xf32>,
    %50 = arith.subf %26, %30 : vector<16x64xf32>
    %cst_38 = arith.constant 1.000000e+00 : f32
    %51 = vector.broadcast %cst_38 : f32 to vector<16x64xf32>
    %52 = arith.mulf %50, %51 : vector<16x64xf32>
    %c0_39 = arith.constant 0 : index
    %c5_40 = arith.constant 5 : index
    %c0_41 = arith.constant 0 : index
    %c0_42 = arith.constant 0 : index
    %53 = vector.load %arg4[%c0_39, %c5_40, %c0_41, %c0_42] : memref<1x8x16x64xf32, #tpu.memory_space<vmem>>, vector<1x1x16x64xf32>
    %54 = vector.shape_cast %53 : vector<1x1x16x64xf32> to vector<16x64xf32>
    %55 = vector.shape_cast %52 : vector<16x64xf32> to vector<1x1x16x64xf32>
    tpu.vector_store %arg4[%c0_39, %c5_40, %c0_41, %c0_42], %55 {strides = array<i32>} : memref<1x8x16x64xf32, #tpu.memory_space<vmem>>, vector<1x1x16x64xf32>,
    %56 = arith.addf %25, %29 : vector<16x64xf32>
    %cst_43 = arith.constant 1.000000e+00 : f32
    %57 = vector.broadcast %cst_43 : f32 to vector<16x64xf32>
    %58 = arith.mulf %56, %57 : vector<16x64xf32>
    %c0_44 = arith.constant 0 : index
    %c2_45 = arith.constant 2 : index
    %c0_46 = arith.constant 0 : index
    %c0_47 = arith.constant 0 : index
    %59 = vector.load %arg4[%c0_44, %c2_45, %c0_46, %c0_47] : memref<1x8x16x64xf32, #tpu.memory_space<vmem>>, vector<1x1x16x64xf32>
    %60 = vector.shape_cast %59 : vector<1x1x16x64xf32> to vector<16x64xf32>
    %61 = vector.shape_cast %58 : vector<16x64xf32> to vector<1x1x16x64xf32>
    tpu.vector_store %arg4[%c0_44, %c2_45, %c0_46, %c0_47], %61 {strides = array<i32>} : memref<1x8x16x64xf32, #tpu.memory_space<vmem>>, vector<1x1x16x64xf32>,
    %62 = arith.subf %25, %29 : vector<16x64xf32>
    %cst_48 = arith.constant 1.000000e+00 : f32
    %63 = vector.broadcast %cst_48 : f32 to vector<16x64xf32>
    %64 = arith.mulf %62, %63 : vector<16x64xf32>
    %c0_49 = arith.constant 0 : index
    %c6_50 = arith.constant 6 : index
    %c0_51 = arith.constant 0 : index
    %c0_52 = arith.constant 0 : index
    %65 = vector.load %arg4[%c0_49, %c6_50, %c0_51, %c0_52] : memref<1x8x16x64xf32, #tpu.memory_space<vmem>>, vector<1x1x16x64xf32>
    %66 = vector.shape_cast %65 : vector<1x1x16x64xf32> to vector<16x64xf32>
    %67 = vector.shape_cast %64 : vector<16x64xf32> to vector<1x1x16x64xf32>
    tpu.vector_store %arg4[%c0_49, %c6_50, %c0_51, %c0_52], %67 {strides = array<i32>} : memref<1x8x16x64xf32, #tpu.memory_space<vmem>>, vector<1x1x16x64xf32>,
    %68 = arith.addf %27, %31 : vector<16x64xf32>
    %cst_53 = arith.constant 1.000000e+00 : f32
    %69 = vector.broadcast %cst_53 : f32 to vector<16x64xf32>
    %70 = arith.mulf %68, %69 : vector<16x64xf32>
    %c0_54 = arith.constant 0 : index
    %c3_55 = arith.constant 3 : index
    %c0_56 = arith.constant 0 : index
    %c0_57 = arith.constant 0 : index
    %71 = vector.load %arg4[%c0_54, %c3_55, %c0_56, %c0_57] : memref<1x8x16x64xf32, #tpu.memory_space<vmem>>, vector<1x1x16x64xf32>
    %72 = vector.shape_cast %71 : vector<1x1x16x64xf32> to vector<16x64xf32>
    %73 = vector.shape_cast %70 : vector<16x64xf32> to vector<1x1x16x64xf32>
    tpu.vector_store %arg4[%c0_54, %c3_55, %c0_56, %c0_57], %73 {strides = array<i32>} : memref<1x8x16x64xf32, #tpu.memory_space<vmem>>, vector<1x1x16x64xf32>,
    %74 = arith.subf %27, %31 : vector<16x64xf32>
    %cst_58 = arith.constant 1.000000e+00 : f32
    %75 = vector.broadcast %cst_58 : f32 to vector<16x64xf32>
    %76 = arith.mulf %74, %75 : vector<16x64xf32>
    %c0_59 = arith.constant 0 : index
    %c7_60 = arith.constant 7 : index
    %c0_61 = arith.constant 0 : index
    %c0_62 = arith.constant 0 : index
    %77 = vector.load %arg4[%c0_59, %c7_60, %c0_61, %c0_62] : memref<1x8x16x64xf32, #tpu.memory_space<vmem>>, vector<1x1x16x64xf32>
    %78 = vector.shape_cast %77 : vector<1x1x16x64xf32> to vector<16x64xf32>
    %79 = vector.shape_cast %76 : vector<16x64xf32> to vector<1x1x16x64xf32>
    tpu.vector_store %arg4[%c0_59, %c7_60, %c0_61, %c0_62], %79 {strides = array<i32>} : memref<1x8x16x64xf32, #tpu.memory_space<vmem>>, vector<1x1x16x64xf32>,
    return
  }
  func.func @transform_0(%arg0: i32, %arg1: i32, %arg2: i32) -> (i32, i32, i32, i32) {
    %c0_i32 = arith.constant 0 : i32
    %c0_i32_0 = arith.constant 0 : i32
    return %c0_i32, %arg0, %arg1, %arg2 : i32, i32, i32, i32
  }
  func.func @transform_1(%arg0: i32, %arg1: i32, %arg2: i32) -> (i32, i32, i32, i32) {
    %c0_i32 = arith.constant 0 : i32
    %c0_i32_0 = arith.constant 0 : i32
    return %arg0, %c0_i32, %arg1, %arg2 : i32, i32, i32, i32
  }
}

</mosaic_0001>

<llo_original>
// kernel: tpu_custom_call.1
$region0: #{tpu_custom_call.1}
  #allocation0 [shape = 'u32[]', space=smem, size = 0x4, offset = 0x4, fixed_abs, tag = 'smem constant byte address 0x4 - core index']
  #allocation1 [shape = 'u32[144,128]{1,0:T(1,128)}', space=vmem, size = 0x12000, scoped, tag = 'internal scratch']
  #allocation6 [shape = 's32[]', space=sflag, size = 0x4, offset = 0, fixed_abs, tag = 'sflag constant byte address 0x0 - dummy sync flag']
  %s0 = inlined_call_operand.hbm [shape: f32[8,2,16,64], index: 0, kind: input, shape index: {}]
  %s1 = inlined_call_operand.hbm [shape: f32[2,8,16,64], index: 1, kind: output, shape index: {}]
  %s2 = sld [smem:[#allocation0]]
  $region41: #{tpu_custom_call.1} parent=0
    _
  %s4 = ssub.s32 1, %s2
  %s5 = scalar_select 0, %s4, %s2
  $region1: #{tpu_custom_call.1} parent=0
    #allocation2 [shape = 'u8[131072]{0}', space=vmem, size = 0x20000, scoped, tag = 'input window, operand 0']
    #allocation3 [shape = 's32[2]{0}', space=sflag, size = 0x8, scoped, tag = 'scoped memory for tpu_custom_call.1']
    #allocation4 [shape = 's32[2]{0}', space=sflag, size = 0x8, scoped, tag = 'scoped memory for tpu_custom_call.1']
    #allocation5 [shape = 'u8[131072]{0}', space=vmem, size = 0x20000, scoped, tag = 'output window, operand 0']
    %6 = vsyncpa [#allocation3], 0
    %s7 = scalar_lea.sflag [#allocation3], 1
    %8 = vsyncpa %s7, 0
    %9 = vsyncpa [#allocation4], 0
    %s10 = scalar_lea.sflag [#allocation4], 1
    %11 = vsyncpa %s10, 0
    loop: start=0, step=1, limit=4
    $region2: #{tpu_custom_call.1} parent=1 // loop_pre_header
      _
    $region3: #{tpu_custom_call.1} parent=1 // loop_header
      %s13 = sphi 0, %s17
      %p14 = scmp.ge.s32.totalorder %s13, 4
      %s20 = sphi 0, %s39
      %s21 = sphi 0, %s35
      %s22 = sphi 0, %s31
      %s23 = sphi 0, %s20
      %s24 = sphi 0, %s21
      %s25 = sphi 0, %s22
      %s26 = sphi 0, %s23
      %s27 = sphi 0, %s24
      %s28 = sphi 0, %s25
      %s46 = sphi 0, %s48
      %s49 = sphi 0, %s46
      %s50 = sphi 0, %s49
      %s66 = sphi 0, %s50
      %s76 = sphi 0, %s78
      %s79 = sphi 0, %s76
      %s80 = sphi 0, %s79
      %s96 = sphi 0, %s80
    $region4: #{tpu_custom_call.1} parent=1 // loop_header_branch
      %16 = sbr.rel (%p14) target = $region8
    $region5: #{tpu_custom_call.1} parent=1 // loop_body
      %s18 = ssub.s32 %s13, 1
      %s19 = ssub.s32 %s13, 2
      %s29 = sadd.s32 1, %s22
      %p30 = scmp.ge.s32.totalorder %s29, 1
      %s31 = scalar_select %p30, 0, %s29
      %s32 = sadd.s32 1, %s21
      %s33 = scalar_select %p30, %s32, %s21
      %p34 = scmp.ge.s32.totalorder %s33, 1
      %s35 = scalar_select %p34, 0, %s33
      %s36 = sadd.s32 1, %s20
      %s37 = scalar_select %p34, %s36, %s20
      %p38 = scmp.ge.s32.totalorder %s37, 2
      %s39 = scalar_select %p38, 0, %s37
      %s40 = ssub.s32 %s20, %s39
      %s41 = ssub.s32 %s21, %s35
      %s42 = sor.u32 %s40, %s41
      %s43 = ssub.s32 %s22, %s31
      %s44 = sor.u32 %s42, %s43
      %p45 = scmp.eq.s32.totalorder %s44, 0
      %s47 = sadd.s32 %s46, 1
      %s48 = scalar_select %p45, %s46, %s47
      %p51 = pneg %p45
      %p52 = scmp.eq.s32.totalorder %s13, 1
      %p53 = por %p51, %p52
      %p54 = scmp.ne.s32.totalorder %s46, %s49
      %p55 = scmp.eq.s32.totalorder %s13, 0
      %p56 = por %p54, %p55
      %p57 = scmp.ne.s32.totalorder %s46, %s49
      %p58 = scmp.eq.s32.totalorder %s18, 1
      %p59 = por %p57, %p58
      %p60 = scmp.ne.s32.totalorder %s49, %s50
      %p61 = scmp.eq.s32.totalorder %s18, 0
      %p62 = por %p60, %p61
      %p63 = scmp.ne.s32.totalorder %s49, %s50
      %p64 = scmp.eq.s32.totalorder %s19, 1
      %p65 = por %p63, %p64
      %p67 = scmp.ne.s32.totalorder %s50, %s66
      %p68 = scmp.eq.s32.totalorder %s19, 0
      %p69 = por %p67, %p68
      %s70 = ssub.s32 %s20, %s39
      %s71 = ssub.s32 %s21, %s35
      %s72 = sor.u32 %s70, %s71
      %s73 = ssub.s32 %s22, %s31
      %s74 = sor.u32 %s72, %s73
      %p75 = scmp.eq.s32.totalorder %s74, 0
      %s77 = sadd.s32 %s76, 1
      %s78 = scalar_select %p75, %s76, %s77
      %p81 = pneg %p75
      %p82 = scmp.eq.s32.totalorder %s13, 1
      %p83 = por %p81, %p82
      %p84 = scmp.ne.s32.totalorder %s76, %s79
      %p85 = scmp.eq.s32.totalorder %s13, 0
      %p86 = por %p84, %p85
      %p87 = scmp.ne.s32.totalorder %s76, %s79
      %p88 = scmp.eq.s32.totalorder %s18, 1
      %p89 = por %p87, %p88
      %p90 = scmp.ne.s32.totalorder %s79, %s80
      %p91 = scmp.eq.s32.totalorder %s18, 0
      %p92 = por %p90, %p91
      %p93 = scmp.ne.s32.totalorder %s79, %s80
      %p94 = scmp.eq.s32.totalorder %s19, 1
      %p95 = por %p93, %p94
      %p97 = scmp.ne.s32.totalorder %s80, %s96
      %p98 = scmp.eq.s32.totalorder %s19, 0
      %p99 = por %p97, %p98
      %p100 = scmp.le.s32.totalorder 1, %s13
      %p101 = scmp.lt.s32.totalorder %s13, 3
      %p102 = pnand %p100, %p101
      %p103 = pneg %p102
      // Predicated region
      $region9: #{tpu_custom_call.1} parent=5 // pred_check
        _
      $region10: #{tpu_custom_call.1} parent=5 // pred_check_branch
        %105 = sbr.rel (%p102) target = $region12
      $region11: #{tpu_custom_call.1} parent=5 // pred_region
        %s106 = ssub.s32 %s13, 1
      $region12: #{tpu_custom_call.1} parent=5 // pred_fallthru
        _
      %p107 = scmp.lt.s32.totalorder %s13, 2
      // Predicated region
      $region13: #{tpu_custom_call.1} parent=5 // pred_check
        %p108 = pneg %p107
      $region14: #{tpu_custom_call.1} parent=5 // pred_check_branch
        %110 = sbr.rel (%p108) target = $region16
      $region15: #{tpu_custom_call.1} parent=5 // pred_region
        // Predicated region
        $region17: #{tpu_custom_call.1} parent=15 // pred_check
          %p111 = pneg %p56
        $region18: #{tpu_custom_call.1} parent=15 // pred_check_branch
          %113 = sbr.rel (%p111) target = $region20
        $region19: #{tpu_custom_call.1} parent=15 // pred_region
          #allocation7 [shape = 'u32[6]{0}', space=smem, size = 0x18, scoped, tag = 'DMA stride descriptor']
          %s114 = sand.u32 %s46, 1
          %s115 = scalar_lea.sflag [#allocation3], %s114
          %s116 = sand.u32 %s46, 1
          %s117 = smul.addr %s116, 128
          %s118 = scalar_lea.vmem [#allocation2], %s117
          %s119 = smul.u32 2, %s21
          %s121 = ssub.s32 2048, 2048
          %122 = vsyncadd %s115, %s121
          %s123 = sadd.s32 %s22, %s119
          %s124 = smul.addr %s20, 2
          %s125 = sadd.s32 %s123, %s124
          %s126 = smul.addr %s125, 128
          %s127 = scalar_lea.hbm %s0, %s126
          %s129 = sshll.u32 1, 14
          %s130 = sxor.u32 4294967295, %s129
          %s132 = sld [smem:[#allocation0]]
          %s133 = sadd.s32 2, %s132
          %s135 = sshll.u32 7, 26
          %s136 = sxor.u32 4294967295, %s135
          %s137 = sand.u32 0, %s136
          %s138 = sshll.u32 %s133, 26
          %s139 = sor.u32 %s137, %s138
          %s140 = sshll.u32 %s118, 4
          %s141 = int_to_ptr.vmem [resolvable:$true] %s140
          %147 = sst [smem:[#allocation7]] 512
          %s148 = scalar_lea.smem [#allocation7], 1
          %149 = sst [smem:[%s148]] 256
          %s150 = scalar_lea.smem [#allocation7], 2
          %151 = sst [smem:[%s150]] 2
          %s152 = scalar_lea.smem [#allocation7], 3
          %153 = sst [smem:[%s152]] 128
          %s154 = scalar_lea.smem [#allocation7], 4
          %155 = sst [smem:[%s154]] 128
          %s156 = scalar_lea.smem [#allocation7], 5
          %157 = sst [smem:[%s156]] 8
          %159 = dma.general %s127, 2048, %s141, %s115, 131072, [#allocation7], %s139, 0
        $region20: #{tpu_custom_call.1} parent=15 // pred_fallthru
          _
      $region16: #{tpu_custom_call.1} parent=5 // pred_fallthru
        _
      %p160 = scmp.le.s32.totalorder 1, %s13
      %p161 = scmp.lt.s32.totalorder %s13, 3
      %p162 = pnand %p160, %p161
      %p163 = pneg %p162
      // Predicated region
      $region21: #{tpu_custom_call.1} parent=5 // pred_check
        _
      $region22: #{tpu_custom_call.1} parent=5 // pred_check_branch
        %165 = sbr.rel (%p162) target = $region24
      $region23: #{tpu_custom_call.1} parent=5 // pred_region
        %s166 = ssub.s32 %s13, 1
        %s167 = sand.u32 %s49, 1
        %s168 = scalar_lea.sflag [#allocation3], %s167
        %s169 = sand.u32 %s49, 1
        %s170 = smul.addr %s169, 128
        %s171 = scalar_lea.vmem [#allocation2], %s170
        // Predicated region
        $region25: #{tpu_custom_call.1} parent=23 // pred_check
          %p172 = pneg %p62
        $region26: #{tpu_custom_call.1} parent=23 // pred_check_branch
          %174 = sbr.rel (%p172) target = $region28
        $region27: #{tpu_custom_call.1} parent=23 // pred_region
          %175 = dma.done %s168, 2048
        $region28: #{tpu_custom_call.1} parent=23 // pred_fallthru
          _
        %s176 = sand.u32 %s49, 1
        %s177 = scalar_lea.sflag [#allocation3], %s176
        %s178 = sand.u32 %s49, 1
        %s179 = smul.addr %s178, 128
        %s180 = scalar_lea.vmem [#allocation2], %s179
        %p181 = pneg %p62
        %p182 = pneg %p59
        %p183 = pneg %p92
        %p184 = pneg %p89
        %s185 = sand.u32 %s79, 1
        %s186 = scalar_lea.sflag [#allocation4], %s185
        %s187 = sand.u32 %s79, 1
        %s188 = smul.addr %s187, 128
        %s189 = scalar_lea.vmem [#allocation5], %s188
        %s190 = smul.u32 2, %s24
        %s191 = smul.u32 2, %s24
        %v192 = vld [vmem:[%s171] sm:$0xff]
        %v193 = vld [vmem:[%s171 + $0x8] sm:$0xff]
        %s194 = scalar_lea.vmem %s171, 16 [#allocation2]
        %v195 = vld [vmem:[%s194] sm:$0xff]
        %v196 = vld [vmem:[%s194 + $0x8] sm:$0xff]
        %v197 = vadd.f32 %v192, %v195
        %v198 = vadd.f32 %v193, %v196
        %v199 = vsub.f32 %v192, %v195
        %v200 = vsub.f32 %v193, %v196
        %s201 = scalar_lea.vmem %s171, 32 [#allocation2]
        %v202 = vld [vmem:[%s201] sm:$0xff]
        %v203 = vld [vmem:[%s201 + $0x8] sm:$0xff]
        %s204 = scalar_lea.vmem %s171, 48 [#allocation2]
        %v205 = vld [vmem:[%s204] sm:$0xff]
        %v206 = vld [vmem:[%s204 + $0x8] sm:$0xff]
        %v207 = vadd.f32 %v202, %v205
        %v208 = vadd.f32 %v203, %v206
        %v209 = vsub.f32 %v202, %v205
        %v210 = vsub.f32 %v203, %v206
        %s211 = scalar_lea.vmem %s171, 64 [#allocation2]
        %v212 = vld [vmem:[%s211] sm:$0xff]
        %v213 = vld [vmem:[%s211 + $0x8] sm:$0xff]
        %s214 = scalar_lea.vmem %s171, 80 [#allocation2]
        %v215 = vld [vmem:[%s214] sm:$0xff]
        %v216 = vld [vmem:[%s214 + $0x8] sm:$0xff]
        %v217 = vadd.f32 %v212, %v215
        %v218 = vadd.f32 %v213, %v216
        %v219 = vsub.f32 %v212, %v215
        %v220 = vsub.f32 %v213, %v216
        %s221 = scalar_lea.vmem %s171, 96 [#allocation2]
        %v222 = vld [vmem:[%s221] sm:$0xff]
        %v223 = vld [vmem:[%s221 + $0x8] sm:$0xff]
        %s224 = scalar_lea.vmem %s171, 112 [#allocation2]
        %v225 = vld [vmem:[%s224] sm:$0xff]
        %v226 = vld [vmem:[%s224 + $0x8] sm:$0xff]
        %v227 = vadd.f32 %v222, %v225
        %v228 = vadd.f32 %v223, %v226
        %v229 = vsub.f32 %v222, %v225
        %v230 = vsub.f32 %v223, %v226
        %v231 = vadd.f32 %v197, %v207
        %v232 = vadd.f32 %v198, %v208
        %v233 = vsub.f32 %v197, %v207
        %v234 = vsub.f32 %v198, %v208
        %v235 = vadd.f32 %v199, %v209
        %v236 = vadd.f32 %v200, %v210
        %v237 = vsub.f32 %v199, %v209
        %v238 = vsub.f32 %v200, %v210
        %v239 = vadd.f32 %v217, %v227
        %v240 = vadd.f32 %v218, %v228
        %v241 = vsub.f32 %v217, %v227
        %v242 = vsub.f32 %v218, %v228
        %v243 = vadd.f32 %v219, %v229
        %v244 = vadd.f32 %v220, %v230
        %v245 = vsub.f32 %v219, %v229
        %v246 = vsub.f32 %v220, %v230
        %v247 = vadd.f32 %v231, %v239
        %v248 = vadd.f32 %v232, %v240
        %vm249 = vcmask 523264
        %250 = vst.msk [vmem:[%s189] sm:$0xff] %vm249, %v247
        %251 = vst.msk [vmem:[%s189 + $0x8] sm:$0xff] %vm249, %v248
        %v252 = vsub.f32 %v231, %v239
        %v253 = vsub.f32 %v232, %v240
        %s254 = scalar_lea.vmem %s189, 64 [#allocation5]
        %255 = vst.msk [vmem:[%s254] sm:$0xff] %vm249, %v252
        %256 = vst.msk [vmem:[%s254 + $0x8] sm:$0xff] %vm249, %v253
        %v257 = vadd.f32 %v235, %v243
        %v258 = vadd.f32 %v236, %v244
        %s259 = scalar_lea.vmem %s189, 16 [#allocation5]
        %260 = vst.msk [vmem:[%s259] sm:$0xff] %vm249, %v257
        %261 = vst.msk [vmem:[%s259 + $0x8] sm:$0xff] %vm249, %v258
        %v262 = vsub.f32 %v235, %v243
        %v263 = vsub.f32 %v236, %v244
        %s264 = scalar_lea.vmem %s189, 80 [#allocation5]
        %265 = vst.msk [vmem:[%s264] sm:$0xff] %vm249, %v262
        %266 = vst.msk [vmem:[%s264 + $0x8] sm:$0xff] %vm249, %v263
        %v267 = vadd.f32 %v233, %v241
        %v268 = vadd.f32 %v234, %v242
        %s269 = scalar_lea.vmem %s189, 32 [#allocation5]
        %270 = vst.msk [vmem:[%s269] sm:$0xff] %vm249, %v267
        %271 = vst.msk [vmem:[%s269 + $0x8] sm:$0xff] %vm249, %v268
        %v272 = vsub.f32 %v233, %v241
        %v273 = vsub.f32 %v234, %v242
        %s274 = scalar_lea.vmem %s189, 96 [#allocation5]
        %275 = vst.msk [vmem:[%s274] sm:$0xff] %vm249, %v272
        %276 = vst.msk [vmem:[%s274 + $0x8] sm:$0xff] %vm249, %v273
        %v277 = vadd.f32 %v237, %v245
        %v278 = vadd.f32 %v238, %v246
        %s279 = scalar_lea.vmem %s189, 48 [#allocation5]
        %280 = vst.msk [vmem:[%s279] sm:$0xff] %vm249, %v277
        %281 = vst.msk [vmem:[%s279 + $0x8] sm:$0xff] %vm249, %v278
        %v282 = vsub.f32 %v237, %v245
        %v283 = vsub.f32 %v238, %v246
        %s284 = scalar_lea.vmem %s189, 112 [#allocation5]
        %285 = vst.msk [vmem:[%s284] sm:$0xff] %vm249, %v282
        %286 = vst.msk [vmem:[%s284 + $0x8] sm:$0xff] %vm249, %v283
        %s287 = sand.u32 %s79, 1
        %s288 = scalar_lea.sflag [#allocation4], %s287
        %s289 = sand.u32 %s79, 1
        %s290 = smul.addr %s289, 128
        %s291 = scalar_lea.vmem [#allocation5], %s290
        // Predicated region
        $region29: #{tpu_custom_call.1} parent=23 // pred_check
          %p292 = pneg %p89
        $region30: #{tpu_custom_call.1} parent=23 // pred_check_branch
          %294 = sbr.rel (%p292) target = $region32
        $region31: #{tpu_custom_call.1} parent=23 // pred_region
          %s295 = smul.u32 2, %s24
          %s297 = ssub.s32 2048, 2048
          %298 = vsyncadd %s288, %s297
          %s299 = sadd.s32 %s25, %s295
          %s300 = smul.addr %s23, 16
          %s301 = sadd.s32 %s299, %s300
          %s302 = smul.addr %s301, 128
          %s303 = scalar_lea.hbm %s1, %s302
          %s304 = sshll.u32 %s291, 4
          %s305 = int_to_ptr.vmem [resolvable:$true] %s304
          %310 = dma.vmem_to_hbm [thread:$0]  %s305, 2048, %s303, %s288, 128, 128, 8
        $region32: #{tpu_custom_call.1} parent=23 // pred_fallthru
          _
      $region24: #{tpu_custom_call.1} parent=5 // pred_fallthru
        _
      %p311 = scmp.le.s32.totalorder 2, %s13
      // Predicated region
      $region33: #{tpu_custom_call.1} parent=5 // pred_check
        %p312 = pneg %p311
      $region34: #{tpu_custom_call.1} parent=5 // pred_check_branch
        %314 = sbr.rel (%p312) target = $region36
      $region35: #{tpu_custom_call.1} parent=5 // pred_region
        %s315 = ssub.s32 %s13, 2
        // Predicated region
        $region37: #{tpu_custom_call.1} parent=35 // pred_check
          %p316 = pneg %p95
        $region38: #{tpu_custom_call.1} parent=35 // pred_check_branch
          %318 = sbr.rel (%p316) target = $region40
        $region39: #{tpu_custom_call.1} parent=35 // pred_region
          %s319 = sand.u32 %s80, 1
          %s320 = scalar_lea.sflag [#allocation4], %s319
          %s321 = sand.u32 %s80, 1
          %s322 = smul.addr %s321, 128
          %s323 = scalar_lea.vmem [#allocation5], %s322
          %324 = dma.done %s320, 2048
        $region40: #{tpu_custom_call.1} parent=35 // pred_fallthru
          _
      $region36: #{tpu_custom_call.1} parent=5 // pred_fallthru
        _
    $region6: #{tpu_custom_call.1} parent=1 // loop_footer
      %s17 = sadd.s32 1, %s13
    $region7: #{tpu_custom_call.1} parent=1 // loop_footer_branch
      %12 = sbr.rel target = $region3
    $region8: #{tpu_custom_call.1} parent=1 // loop_exit
      _
    %325 = vsyncpa [#allocation3], 1
    %s326 = scalar_lea.sflag [#allocation3], 1
    %327 = vsyncpa %s326, 1
    %328 = vsyncpa [#allocation4], 1
    %s329 = scalar_lea.sflag [#allocation4], 1
    %330 = vsyncpa %s329, 1

</llo_original>
